<compile_context>
chip_gen: v6e
topology: v6e:2x2x1
jax: 0.10.0
libtpu: 0.0.40
codegen_flags: <defaults>
</compile_context>

<pallas_src>
import functools

import jax
import jax.numpy as jnp
from jax import lax
from jax.experimental import pallas as pl
from jax.experimental.pallas import tpu as pltpu


def _round_up(x, m):
    return ((x + m - 1) // m) * m


def _vmem_budget_bytes():
    """(usable budget, vmem limit handed to the compiler), derived from the chip."""
    try:
        cap = int(pltpu.get_tpu_info().vmem_capacity_bytes)
    except Exception:  # pragma: no cover - conservative fallback (v7x per-TC VMEM)
        cap = 64 * 1024 * 1024
    return int(cap * 0.70), int(cap * 0.85)


def _ro_tile_candidates(ro):
    """Tile sizes for the phase-packed output-channel axis (full, or 128-multiples)."""
    cands = {ro}
    for t in range(128, ro, 128):
        if ro % t == 0:
            cands.add(t)
    return sorted(cands, reverse=True)


def _ta_candidates(ha):
    """Row-tile sizes (multiples of 8 dividing HA), largest first."""
    cands = [t for t in range(8, min(ha, 256) + 1, 8) if ha % t == 0]
    return sorted(cands, reverse=True) or [ha]


def _pick_tiles(C, Ro, Hmax, Wmax, Dmax, itemsize, budget):
    """Budget-aware (HA, WA, TA, TRo) accounting for the resident slabs (x2 buffers)."""
    WA = _round_up(max(Wmax, 8), 8)
    HA = _round_up(max(Hmax, 8), 8)
    Wp = WA + Dmax - 1
    Hp = HA + Dmax - 1
    in_bytes = 2 * Hp * Wp * C * itemsize          # resident padded input slab
    t2 = Dmax * Dmax

    ro_cands = _ro_tile_candidates(Ro)
    TRo = ro_cands[-1]                              # smallest as a fallback
    for cand in ro_cands:
        w_bytes = 2 * t2 * C * cand * itemsize
        o_bytes = 2 * 8 * WA * cand * itemsize      # smallest row tile
        if in_bytes + w_bytes + o_bytes <= budget:
            TRo = cand
            break
    # TODO(synk): for C*Co large enough that even TRo=128 doesn't fit alongside the
    #             resident input slab, add a tap-axis (K) tiling grid dimension.

    w_bytes = 2 * t2 * C * TRo * itemsize
    TA = 8
    for cand in _ta_candidates(HA):
        if in_bytes + w_bytes + 2 * cand * WA * TRo * itemsize <= budget:
            TA = cand
            break
    return HA, WA, TA, TRo


def _fused_upsample_kernel(xp_ref, w_ref, b_ref, o_ref, *, ta, wa, dmax):
    """One (ro_tile, batch, row_tile) step of the fused transposed conv.

    xp_ref: (Hp, Wp, C)           padded NHWC input, VMEM-resident for this batch elem
    w_ref:  (Dmax*Dmax, C, TRo)   phase-packed tap weights for this Ro tile
    b_ref:  (1, TRo)              phase-packed bias (f32)
    o_ref:  (TA, WA, TRo)         phase-major output rows a0 .. a0+TA-1
    """
    a0 = pl.program_id(2) * ta
    bias = b_ref[...].astype(jnp.float32)           # (1, TRo), loop-invariant
    tro = o_ref.shape[-1]

    def row_body(r, carry):
        acc = jnp.zeros((wa, tro), jnp.float32)
        for th in range(dmax):                       # in-kernel im2col: shifted slices
            row = xp_ref[a0 + r + th]                # (Wp, C)
            for tw in range(dmax):
                win = row[tw:tw + wa, :]             # (WA, C)
                acc = acc + jnp.dot(win, w_ref[th * dmax + tw],
                                    preferred_element_type=jnp.float32)
        o_ref[r] = (acc + bias).astype(o_ref.dtype)  # lane-dense (WA, TRo) store
        return carry

    lax.fori_loop(0, ta, row_body, 0)


@functools.partial(jax.jit, static_argnames=("ks", "stride"))
def transposed_upsample(x_nchw, weight, bias, *, ks=5, stride=2):
    """Equivalent of nn.ConvTranspose2d(C, Co, kernel_size=ks, stride=stride)(x).

    x_nchw: (N, C, H, W)     weight: (C, Co, ks, ks) (PyTorch layout)     bias: (Co,)
    returns (N, Co, Ho, Wo) with Ho = (H-1)*stride + ks (same for W).
    """
    N, C, H, W = x_nchw.shape
    Co = weight.shape[1]
    s = stride
    Ho = (H - 1) * s + ks
    Wo = (W - 1) * s + ks

    Dmax = -(-ks // s)                  # taps per axis after phase decomposition
    Hmax = H - 1 + Dmax                 # phase-output rows of the largest phase
    Wmax = W - 1 + Dmax
    Ro = s * s * Co                     # phases folded into the output-channel dim

    dtype = x_nchw.dtype
    itemsize = jnp.dtype(dtype).itemsize
    budget, vmem_limit = _vmem_budget_bytes()
    HA, WA, TA, TRo = _pick_tiles(C, Ro, Hmax, Wmax, Dmax, itemsize, budget)
    Hp = HA + Dmax - 1
    Wp = WA + Dmax - 1
    P = Dmax - 1

    # NCHW -> NHWC and zero-pad so every phase/tap window is a plain shifted slice.
    x_nhwc = jnp.transpose(x_nchw, (0, 2, 3, 1))
    xp = jnp.pad(x_nhwc, ((0, 0), (P, HA - H), (P, WA - W), (0, 0)))

    # Phase-packed tap weights:
    #   w_all[th*Dmax+tw, ci, (rh*s+rw)*Co+co] = weight[ci, co, kh, kw]
    #   with kh = s*(Dmax-1-th)+rh, kw = s*(Dmax-1-tw)+rw, and 0 when the tap falls
    #   outside the ks x ks kernel (phases with fewer real taps).
    zeros_cc = jnp.zeros((C, Co), weight.dtype)
    taps = []
    for th in range(Dmax):
        for tw in range(Dmax):
            blocks = []
            for rh in range(s):
                for rw in range(s):
                    kh = s * (Dmax - 1 - th) + rh
                    kw = s * (Dmax - 1 - tw) + rw
                    blocks.append(weight[:, :, kh, kw] if (kh < ks and kw < ks)
                                  else zeros_cc)
            taps.append(jnp.concatenate(blocks, axis=1))        # (C, Ro)
    w_all = jnp.stack(taps, axis=0).astype(dtype)                # (Dmax*Dmax, C, Ro)
    bias_all = jnp.tile(bias, s * s).reshape(1, Ro).astype(jnp.float32)

    kernel = functools.partial(_fused_upsample_kernel, ta=TA, wa=WA, dmax=Dmax)

    y = pl.pallas_call(
        kernel,
        out_shape=jax.ShapeDtypeStruct((N, HA, WA, Ro), dtype),
        grid_spec=pltpu.PrefetchScalarGridSpec(
            num_scalar_prefetch=0,
            grid=(Ro // TRo, N, HA // TA),
            in_specs=[
                # full padded image per batch element; constant across ro/row tiles
                pl.BlockSpec((None, Hp, Wp, C), lambda ro, n, rt: (n, 0, 0, 0)),
                # phase-packed weights: resident across batch and row tiles
                pl.BlockSpec((Dmax * Dmax, C, TRo), lambda ro, n, rt: (0, 0, ro)),
                pl.BlockSpec((1, TRo), lambda ro, n, rt: (0, ro)),
            ],
            out_specs=pl.BlockSpec((None, TA, WA, TRo),
                                   lambda ro, n, rt: (n, rt, 0, ro)),
        ),
        compiler_params=pltpu.CompilerParams(
            dimension_semantics=("parallel", "parallel", "arbitrary"),
            vmem_limit_bytes=vmem_limit,
        ),
    )(xp, w_all, bias_all)

    # Un-interleave the s*s phases back into NCHW with one dense reshape/transpose.
    y = y.reshape(N, HA, WA, s, s, Co)
    y = jnp.transpose(y, (0, 5, 1, 3, 2, 4)).reshape(N, Co, HA * s, WA * s)
    return y[:, :, :Ho, :Wo]


def _reference(x_nchw, weight, bias, *, ks=5, stride=2):
    """Pure-JAX reference for ConvTranspose2d via lhs-dilated conv."""
    wf = jnp.transpose(weight[:, :, ::-1, ::-1], (1, 0, 2, 3))   # (Co, Ci, kh, kw)
    y = lax.conv_general_dilated(
        x_nchw,
        wf,
        window_strides=(1, 1),
        padding=((ks - 1, ks - 1), (ks - 1, ks - 1)),
        lhs_dilation=(stride, stride),
        dimension_numbers=("NCHW", "OIHW", "NCHW"),
    )
    return y + bias[None, :, None, None]


if __name__ == "__main__":
    key = jax.random.PRNGKey(0)
    kx, kw, kb = jax.random.split(key, 3)

    N, C, H, W = 2, 4, 16, 16
    Co, ks, stride = 4, 5, 2

    x = jax.random.normal(kx, (N, C, H, W), dtype=jnp.float32)
    # PyTorch ConvTranspose2d weight shape: (in_channels, out_channels, kH, kW)
    weight = jax.random.normal(kw, (C, Co, ks, ks), dtype=jnp.float32) * 0.05
    bias = jax.random.normal(kb, (Co,), dtype=jnp.float32) * 0.01

    y = transposed_upsample(x, weight, bias, ks=ks, stride=stride)
    y = jax.block_until_ready(y)

    y_ref = _reference(x, weight, bias, ks=ks, stride=stride)
    assert y.shape == (N, Co, (H - 1) * stride + ks, (W - 1) * stride + ks), y.shape
    assert jnp.allclose(y, y_ref, atol=1e-4, rtol=1e-4), float(
        jnp.max(jnp.abs(y - y_ref))
    )

    print("KERNEL_OK")
</pallas_src>

<mosaic_0001>
module attributes {stable_mosaic.version = 11 : i64} {
  func.func @_fused_upsample_kernel(%arg0: i32, %arg1: i32, %arg2: i32, %arg3: memref<1x26x26x4xf32, #tpu.memory_space<vmem>>, %arg4: memref<9x4x16xf32, #tpu.memory_space<vmem>>, %arg5: memref<1x16xf32, #tpu.memory_space<vmem>>, %arg6: memref<1x24x24x16xf32, #tpu.memory_space<vmem>>) attributes {dimension_semantics = [#tpu.dimension_semantics<parallel>, #tpu.dimension_semantics<parallel>, #tpu.dimension_semantics<arbitrary>], iteration_bounds = array<i64: 1, 2, 1>, scalar_prefetch = 0 : i64, scratch_operands = 0 : i64, tpu.core_type = #tpu.core_type<tc>, window_params = [{transform_indices = @transform_0, window_bounds = array<i64: 1, 26, 26, 4>}, {transform_indices = @transform_1, window_bounds = array<i64: 9, 4, 16>}, {transform_indices = @transform_2, window_bounds = array<i64: 1, 16>}, {transform_indices = @transform_3, window_bounds = array<i64: 1, 24, 24, 16>}]} {
    %c24_i32 = arith.constant 24 : i32
    %0 = arith.muli %arg2, %c24_i32 : i32
    %c0 = arith.constant 0 : index
    %c0_0 = arith.constant 0 : index
    %1 = vector.load %arg5[%c0, %c0_0] : memref<1x16xf32, #tpu.memory_space<vmem>>, vector<1x16xf32>
    %c0_i32 = arith.constant 0 : i32
    %c24_i32_1 = arith.constant 24 : i32
    %2 = arith.addi %c0_i32, %c24_i32_1 : i32
    %c1_i32 = arith.constant 1 : i32
    scf.for %arg7 = %c0_i32 to %2 step %c1_i32  : i32 {
      %cst = arith.constant 0.000000e+00 : f32
      %3 = vector.broadcast %cst : f32 to vector<24x16xf32>
      %4 = arith.addi %0, %arg7 : i32
      %c0_i32_3 = arith.constant 0 : i32
      %5 = arith.addi %4, %c0_i32_3 : i32
      %c0_4 = arith.constant 0 : index
      %6 = arith.index_cast %5 : i32 to index
      %c0_5 = arith.constant 0 : index
      %c0_6 = arith.constant 0 : index
      %7 = vector.load %arg3[%c0_4, %6, %c0_5, %c0_6] : memref<1x26x26x4xf32, #tpu.memory_space<vmem>>, vector<1x1x26x4xf32>
      %8 = vector.shape_cast %7 : vector<1x1x26x4xf32> to vector<26x4xf32>
      %9 = vector.extract_strided_slice %8 {offsets = [0, 0], sizes = [24, 4], strides = [1, 1]} : vector<26x4xf32> to vector<24x4xf32>
      %c0_7 = arith.constant 0 : index
      %c0_8 = arith.constant 0 : index
      %c0_9 = arith.constant 0 : index
      %10 = vector.load %arg4[%c0_7, %c0_8, %c0_9] : memref<9x4x16xf32, #tpu.memory_space<vmem>>, vector<1x4x16xf32>
      %11 = vector.shape_cast %10 : vector<1x4x16xf32> to vector<4x16xf32>
      %cst_10 = arith.constant dense<0.000000e+00> : vector<24x16xf32>
      %12 = tpu.matmul %9, %11, %cst_10 {dimension_numbers = #tpu.dot_dimension_numbers<[1], [0], [0], [1], [0, 0, 1, 1], [], []>} : vector<24x4xf32>, vector<4x16xf32>, vector<24x16xf32> -> vector<24x16xf32>
      %13 = arith.addf %3, %12 : vector<24x16xf32>
      %14 = vector.extract_strided_slice %8 {offsets = [1, 0], sizes = [24, 4], strides = [1, 1]} : vector<26x4xf32> to vector<24x4xf32>
      %c1 = arith.constant 1 : index
      %c0_11 = arith.constant 0 : index
      %c0_12 = arith.constant 0 : index
      %15 = vector.load %arg4[%c1, %c0_11, %c0_12] : memref<9x4x16xf32, #tpu.memory_space<vmem>>, vector<1x4x16xf32>
      %16 = vector.shape_cast %15 : vector<1x4x16xf32> to vector<4x16xf32>
      %cst_13 = arith.constant dense<0.000000e+00> : vector<24x16xf32>
      %17 = tpu.matmul %14, %16, %cst_13 {dimension_numbers = #tpu.dot_dimension_numbers<[1], [0], [0], [1], [0, 0, 1, 1], [], []>} : vector<24x4xf32>, vector<4x16xf32>, vector<24x16xf32> -> vector<24x16xf32>
      %18 = arith.addf %13, %17 : vector<24x16xf32>
      %19 = vector.extract_strided_slice %8 {offsets = [2, 0], sizes = [24, 4], strides = [1, 1]} : vector<26x4xf32> to vector<24x4xf32>
      %c2 = arith.constant 2 : index
      %c0_14 = arith.constant 0 : index
      %c0_15 = arith.constant 0 : index
      %20 = vector.load %arg4[%c2, %c0_14, %c0_15] : memref<9x4x16xf32, #tpu.memory_space<vmem>>, vector<1x4x16xf32>
      %21 = vector.shape_cast %20 : vector<1x4x16xf32> to vector<4x16xf32>
      %cst_16 = arith.constant dense<0.000000e+00> : vector<24x16xf32>
      %22 = tpu.matmul %19, %21, %cst_16 {dimension_numbers = #tpu.dot_dimension_numbers<[1], [0], [0], [1], [0, 0, 1, 1], [], []>} : vector<24x4xf32>, vector<4x16xf32>, vector<24x16xf32> -> vector<24x16xf32>
      %23 = arith.addf %18, %22 : vector<24x16xf32>
      %24 = arith.addi %0, %arg7 : i32
      %c1_i32_17 = arith.constant 1 : i32
      %25 = arith.addi %24, %c1_i32_17 : i32
      %c0_18 = arith.constant 0 : index
      %26 = arith.index_cast %25 : i32 to index
      %c0_19 = arith.constant 0 : index
      %c0_20 = arith.constant 0 : index
      %27 = vector.load %arg3[%c0_18, %26, %c0_19, %c0_20] : memref<1x26x26x4xf32, #tpu.memory_space<vmem>>, vector<1x1x26x4xf32>
      %28 = vector.shape_cast %27 : vector<1x1x26x4xf32> to vector<26x4xf32>
      %29 = vector.extract_strided_slice %28 {offsets = [0, 0], sizes = [24, 4], strides = [1, 1]} : vector<26x4xf32> to vector<24x4xf32>
      %c3 = arith.constant 3 : index
      %c0_21 = arith.constant 0 : index
      %c0_22 = arith.constant 0 : index
      %30 = vector.load %arg4[%c3, %c0_21, %c0_22] : memref<9x4x16xf32, #tpu.memory_space<vmem>>, vector<1x4x16xf32>
      %31 = vector.shape_cast %30 : vector<1x4x16xf32> to vector<4x16xf32>
      %cst_23 = arith.constant dense<0.000000e+00> : vector<24x16xf32>
      %32 = tpu.matmul %29, %31, %cst_23 {dimension_numbers = #tpu.dot_dimension_numbers<[1], [0], [0], [1], [0, 0, 1, 1], [], []>} : vector<24x4xf32>, vector<4x16xf32>, vector<24x16xf32> -> vector<24x16xf32>
      %33 = arith.addf %23, %32 : vector<24x16xf32>
      %34 = vector.extract_strided_slice %28 {offsets = [1, 0], sizes = [24, 4], strides = [1, 1]} : vector<26x4xf32> to vector<24x4xf32>
      %c4 = arith.constant 4 : index
      %c0_24 = arith.constant 0 : index
      %c0_25 = arith.constant 0 : index
      %35 = vector.load %arg4[%c4, %c0_24, %c0_25] : memref<9x4x16xf32, #tpu.memory_space<vmem>>, vector<1x4x16xf32>
      %36 = vector.shape_cast %35 : vector<1x4x16xf32> to vector<4x16xf32>
      %cst_26 = arith.constant dense<0.000000e+00> : vector<24x16xf32>
      %37 = tpu.matmul %34, %36, %cst_26 {dimension_numbers = #tpu.dot_dimension_numbers<[1], [0], [0], [1], [0, 0, 1, 1], [], []>} : vector<24x4xf32>, vector<4x16xf32>, vector<24x16xf32> -> vector<24x16xf32>
      %38 = arith.addf %33, %37 : vector<24x16xf32>
      %39 = vector.extract_strided_slice %28 {offsets = [2, 0], sizes = [24, 4], strides = [1, 1]} : vector<26x4xf32> to vector<24x4xf32>
      %c5 = arith.constant 5 : index
      %c0_27 = arith.constant 0 : index
      %c0_28 = arith.constant 0 : index
      %40 = vector.load %arg4[%c5, %c0_27, %c0_28] : memref<9x4x16xf32, #tpu.memory_space<vmem>>, vector<1x4x16xf32>
      %41 = vector.shape_cast %40 : vector<1x4x16xf32> to vector<4x16xf32>
      %cst_29 = arith.constant dense<0.000000e+00> : vector<24x16xf32>
      %42 = tpu.matmul %39, %41, %cst_29 {dimension_numbers = #tpu.dot_dimension_numbers<[1], [0], [0], [1], [0, 0, 1, 1], [], []>} : vector<24x4xf32>, vector<4x16xf32>, vector<24x16xf32> -> vector<24x16xf32>
      %43 = arith.addf %38, %42 : vector<24x16xf32>
      %44 = arith.addi %0, %arg7 : i32
      %c2_i32 = arith.constant 2 : i32
      %45 = arith.addi %44, %c2_i32 : i32
      %c0_30 = arith.constant 0 : index
      %46 = arith.index_cast %45 : i32 to index
      %c0_31 = arith.constant 0 : index
      %c0_32 = arith.constant 0 : index
      %47 = vector.load %arg3[%c0_30, %46, %c0_31, %c0_32] : memref<1x26x26x4xf32, #tpu.memory_space<vmem>>, vector<1x1x26x4xf32>
      %48 = vector.shape_cast %47 : vector<1x1x26x4xf32> to vector<26x4xf32>
      %49 = vector.extract_strided_slice %48 {offsets = [0, 0], sizes = [24, 4], strides = [1, 1]} : vector<26x4xf32> to vector<24x4xf32>
      %c6 = arith.constant 6 : index
      %c0_33 = arith.constant 0 : index
      %c0_34 = arith.constant 0 : index
      %50 = vector.load %arg4[%c6, %c0_33, %c0_34] : memref<9x4x16xf32, #tpu.memory_space<vmem>>, vector<1x4x16xf32>
      %51 = vector.shape_cast %50 : vector<1x4x16xf32> to vector<4x16xf32>
      %cst_35 = arith.constant dense<0.000000e+00> : vector<24x16xf32>
      %52 = tpu.matmul %49, %51, %cst_35 {dimension_numbers = #tpu.dot_dimension_numbers<[1], [0], [0], [1], [0, 0, 1, 1], [], []>} : vector<24x4xf32>, vector<4x16xf32>, vector<24x16xf32> -> vector<24x16xf32>
      %53 = arith.addf %43, %52 : vector<24x16xf32>
      %54 = vector.extract_strided_slice %48 {offsets = [1, 0], sizes = [24, 4], strides = [1, 1]} : vector<26x4xf32> to vector<24x4xf32>
      %c7 = arith.constant 7 : index
      %c0_36 = arith.constant 0 : index
      %c0_37 = arith.constant 0 : index
      %55 = vector.load %arg4[%c7, %c0_36, %c0_37] : memref<9x4x16xf32, #tpu.memory_space<vmem>>, vector<1x4x16xf32>
      %56 = vector.shape_cast %55 : vector<1x4x16xf32> to vector<4x16xf32>
      %cst_38 = arith.constant dense<0.000000e+00> : vector<24x16xf32>
      %57 = tpu.matmul %54, %56, %cst_38 {dimension_numbers = #tpu.dot_dimension_numbers<[1], [0], [0], [1], [0, 0, 1, 1], [], []>} : vector<24x4xf32>, vector<4x16xf32>, vector<24x16xf32> -> vector<24x16xf32>
      %58 = arith.addf %53, %57 : vector<24x16xf32>
      %59 = vector.extract_strided_slice %48 {offsets = [2, 0], sizes = [24, 4], strides = [1, 1]} : vector<26x4xf32> to vector<24x4xf32>
      %c8 = arith.constant 8 : index
      %c0_39 = arith.constant 0 : index
      %c0_40 = arith.constant 0 : index
      %60 = vector.load %arg4[%c8, %c0_39, %c0_40] : memref<9x4x16xf32, #tpu.memory_space<vmem>>, vector<1x4x16xf32>
      %61 = vector.shape_cast %60 : vector<1x4x16xf32> to vector<4x16xf32>
      %cst_41 = arith.constant dense<0.000000e+00> : vector<24x16xf32>
      %62 = tpu.matmul %59, %61, %cst_41 {dimension_numbers = #tpu.dot_dimension_numbers<[1], [0], [0], [1], [0, 0, 1, 1], [], []>} : vector<24x4xf32>, vector<4x16xf32>, vector<24x16xf32> -> vector<24x16xf32>
      %63 = arith.addf %58, %62 : vector<24x16xf32>
      %64 = vector.broadcast %1 : vector<1x16xf32> to vector<24x16xf32>
      %65 = arith.addf %63, %64 : vector<24x16xf32>
      %c0_42 = arith.constant 0 : index
      %66 = arith.index_cast %arg7 : i32 to index
      %c0_43 = arith.constant 0 : index
      %c0_44 = arith.constant 0 : index
      %67 = vector.load %arg6[%c0_42, %66, %c0_43, %c0_44] : memref<1x24x24x16xf32, #tpu.memory_space<vmem>>, vector<1x1x24x16xf32>
      %68 = vector.shape_cast %67 : vector<1x1x24x16xf32> to vector<24x16xf32>
      %69 = vector.shape_cast %65 : vector<24x16xf32> to vector<1x1x24x16xf32>
      tpu.vector_store %arg6[%c0_42, %66, %c0_43, %c0_44], %69 {strides = array<i32>} : memref<1x24x24x16xf32, #tpu.memory_space<vmem>>, vector<1x1x24x16xf32>,
    }
    %c24_i32_2 = arith.constant 24 : i32
    return
  }
  func.func @transform_0(%arg0: i32, %arg1: i32, %arg2: i32) -> (i32, i32, i32, i32) {
    %c0_i32 = arith.constant 0 : i32
    %c0_i32_0 = arith.constant 0 : i32
    %c0_i32_1 = arith.constant 0 : i32
    %c0_i32_2 = arith.constant 0 : i32
    return %arg1, %c0_i32, %c0_i32_0, %c0_i32_1 : i32, i32, i32, i32
  }
  func.func @transform_1(%arg0: i32, %arg1: i32, %arg2: i32) -> (i32, i32, i32) {
    %c0_i32 = arith.constant 0 : i32
    %c0_i32_0 = arith.constant 0 : i32
    %c0_i32_1 = arith.constant 0 : i32
    return %c0_i32, %c0_i32_0, %arg0 : i32, i32, i32
  }
  func.func @transform_2(%arg0: i32, %arg1: i32, %arg2: i32) -> (i32, i32) {
    %c0_i32 = arith.constant 0 : i32
    %c0_i32_0 = arith.constant 0 : i32
    return %c0_i32, %arg0 : i32, i32
  }
  func.func @transform_3(%arg0: i32, %arg1: i32, %arg2: i32) -> (i32, i32, i32, i32) {
    %c0_i32 = arith.constant 0 : i32
    %c0_i32_0 = arith.constant 0 : i32
    return %arg1, %arg2, %c0_i32, %arg0 : i32, i32, i32, i32
  }
}

</mosaic_0001>

<llo_original>
// kernel: tile.8
$region0: #{tile.8}
  #allocation2 [shape = 's32[1]{0}', space=sflag, size = 0x4, scoped, tag = 'scoped memory for tile.8']
  %s0 = inlined_call_operand.hbm [shape: f32[4], index: 0, kind: input, shape index: {}]
  %s1 = inlined_call_operand.vmem [shape: f32[4,4], index: 1, kind: output, shape index: {}]
  $region1: #{tile.8} parent=0
    #allocation0 [shape = 'u8[512]{0}', space=vmem, size = 0x400, scoped, tag = 'operand span for operand 0']
    #allocation1 [shape = 's32[1]{0}', space=sflag, size = 0x4, scoped, tag = 'scoped memory for tile.8']
    %2 = vsyncpa [#allocation1], 0
    // Predicated region
    $region2: #{tile.8} parent=1 // pred_check
      _
    $region3: #{tile.8} parent=1 // pred_check_branch
      %4 = sbr.rel (0) target = $region5
    $region4: #{tile.8} parent=1 // pred_region
      %s6 = ssub.s32 16, 16
      %7 = vsyncadd [#allocation1], %s6
      %s9 = sshll.u32 [#allocation0], 4
      %s10 = int_to_ptr.vmem [resolvable:$true] %s9
      %12 = dma.hbm_to_vmem [thread:$0]  %s0, 16, %s10, [#allocation1]
    $region5: #{tile.8} parent=1 // pred_fallthru
      _
    // Predicated region
    $region6: #{tile.8} parent=1 // pred_check
      _
    $region7: #{tile.8} parent=1 // pred_check_branch
      %14 = sbr.rel (0) target = $region9
    $region8: #{tile.8} parent=1 // pred_region
      %15 = dma.done [#allocation1], 16
    $region9: #{tile.8} parent=1 // pred_fallthru
      _
    %v16 = vld [vmem:[#allocation0] ss:$0 sm:$0xff]
    %17 = vst [vmem:[%s1] sm:$0xf] %v16
    %18 = vsyncpa [#allocation1], 1

// kernel: tile.9
$region0: #{tile.9}
  %s0 = inlined_call_operand.vmem [shape: f32[4,4], index: 0, kind: input, shape index: {}]
  %s1 = inlined_call_operand.vmem [shape: f32[1,16], index: 1, kind: output, shape index: {}]
  $region1: #{tile.9} parent=0
    #allocation0 [shape = 'u8[4096]{0}', space=vmem, size = 0x1000, scoped, tag = 'scoped mem for output reshape']
    #allocation1 [shape = 'u8[4096]{0}', space=vmem, size = 0x1000, scoped, tag = 'scoped mem for input reshape']
    %s3 = sshll.u32 1, 4
    %s4 = ssub.s32 %s3, 1
    %v5 = vld [vmem:[%s0] sm:%s4]
    %6 = vst [vmem:[#allocation1] sm:%s4] %v5
    %v7 = vld [vmem:[#allocation1] sm:$0x1]
    %vm8 = vcmask 31744
    %9 = vst.msk [vmem:[#allocation0] sm:$0x1] %vm8, %v7
    %s10 = scalar_lea.vmem [#allocation1], 3
    %v11 = vld [vmem:[%s10] sm:$0x1]
    %12 = vrot.lane.b32.xlu0 %v11, 12
    %v13 = vpop.permute.xlu0 %12
    %vm14 = vcmask 130144
    %15 = vst.msk [vmem:[#allocation0] sm:$0x1] %vm14, %v13
    %s16 = scalar_lea.vmem [#allocation1], 2
    %v17 = vld [vmem:[%s16] sm:$0x1]
    %18 = vrot.lane.b32.xlu0 %v17, 8
    %v19 = vpop.permute.xlu0 %18
    %vm20 = vcmask 97344
    %21 = vst.msk [vmem:[#allocation0] sm:$0x1] %vm20, %v19
    %s22 = scalar_lea.vmem [#allocation1], 1
    %v23 = vld [vmem:[%s22] sm:$0x1]
    %24 = vrot.lane.b32.xlu0 %v23, 4
    %v25 = vpop.permute.xlu0 %24
    %vm26 = vcmask 64544
    %27 = vst.msk [vmem:[#allocation0] sm:$0x1] %vm26, %v25
    %s29 = sshll.u32 1, 1
    %s30 = ssub.s32 %s29, 1
    %v32 = vld [vmem:[#allocation0] sm:%s30]
    %s33 = sshll.u32 1, 1
    %s34 = ssub.s32 %s33, 1
    %35 = vst [vmem:[%s1] sm:%s34] %v32

// kernel: transposed_upsample.1
$region0: #{transposed_upsample.1}
  #allocation0 [shape = 'u32[]', space=smem, size = 0x4, offset = 0x4, fixed_abs, tag = 'smem constant byte address 0x4 - core index']
  #allocation1 [shape = 'u32[144,128]{1,0:T(1,128)}', space=vmem, size = 0x12000, scoped, tag = 'internal scratch']
  %s0 = inlined_call_operand.vmem [shape: f32[2,26,26,4], index: 0, kind: input, shape index: {}]
  %s1 = inlined_call_operand.vmem [shape: f32[9,4,16], index: 1, kind: input, shape index: {}]
  %s2 = inlined_call_operand.vmem [shape: f32[1,16], index: 2, kind: input, shape index: {}]
  %s3 = inlined_call_operand.vmem [shape: f32[2,24,24,16], index: 3, kind: output, shape index: {}]
  %s4 = sld [smem:[#allocation0]]
  $region52: #{transposed_upsample.1} parent=0
    _
  %s6 = ssub.s32 1, %s4
  %s7 = scalar_select 0, %s6, %s4
  loop: start=0, step=1, limit=4
  $region2: #{transposed_upsample.1} parent=0 // loop_pre_header
    _
  $region3: #{transposed_upsample.1} parent=0 // loop_header
    %s9 = sphi 0, %s13
    %p10 = scmp.ge.s32.totalorder %s9, 4
    %s16 = sphi 0, %s35
    %s17 = sphi 0, %s31
    %s18 = sphi 0, %s27
    %s19 = sphi 0, %s16
    %s20 = sphi 0, %s17
    %s21 = sphi 0, %s18
    %s22 = sphi 0, %s19
    %s23 = sphi 0, %s20
    %s24 = sphi 0, %s21
    %s38 = sphi 0, %s40
    %s41 = sphi 0, %s38
    %s42 = sphi 0, %s41
    %s58 = sphi 0, %s42
    %s64 = sphi 0, %s66
    %s67 = sphi 0, %s64
    %s68 = sphi 0, %s67
    %s84 = sphi 0, %s68
    %s90 = sphi 0, %s92
    %s93 = sphi 0, %s90
    %s94 = sphi 0, %s93
    %s110 = sphi 0, %s94
    %s120 = sphi 0, %s122
    %s123 = sphi 0, %s120
    %s124 = sphi 0, %s123
    %s140 = sphi 0, %s124
  $region4: #{transposed_upsample.1} parent=0 // loop_header_branch
    %12 = sbr.rel (%p10) target = $region8
  $region5: #{transposed_upsample.1} parent=0 // loop_body
    %s14 = ssub.s32 %s9, 1
    %s15 = ssub.s32 %s9, 2
    %s25 = sadd.s32 1, %s18
    %p26 = scmp.ge.s32.totalorder %s25, 1
    %s27 = scalar_select %p26, 0, %s25
    %s28 = sadd.s32 1, %s17
    %s29 = scalar_select %p26, %s28, %s17
    %p30 = scmp.ge.s32.totalorder %s29, 2
    %s31 = scalar_select %p30, 0, %s29
    %s32 = sadd.s32 1, %s16
    %s33 = scalar_select %p30, %s32, %s16
    %p34 = scmp.ge.s32.totalorder %s33, 1
    %s35 = scalar_select %p34, 0, %s33
    %s36 = ssub.s32 %s17, %s31
    %p37 = scmp.eq.s32.totalorder %s36, 0
    %s39 = sadd.s32 %s38, 1
    %s40 = scalar_select %p37, %s38, %s39
    %p43 = pneg %p37
    %p44 = scmp.eq.s32.totalorder %s9, 1
    %p45 = por %p43, %p44
    %p46 = scmp.ne.s32.totalorder %s38, %s41
    %p47 = scmp.eq.s32.totalorder %s9, 0
    %p48 = por %p46, %p47
    %p49 = scmp.ne.s32.totalorder %s38, %s41
    %p50 = scmp.eq.s32.totalorder %s14, 1
    %p51 = por %p49, %p50
    %p52 = scmp.ne.s32.totalorder %s41, %s42
    %p53 = scmp.eq.s32.totalorder %s14, 0
    %p54 = por %p52, %p53
    %p55 = scmp.ne.s32.totalorder %s41, %s42
    %p56 = scmp.eq.s32.totalorder %s15, 1
    %p57 = por %p55, %p56
    %p59 = scmp.ne.s32.totalorder %s42, %s58
    %p60 = scmp.eq.s32.totalorder %s15, 0
    %p61 = por %p59, %p60
    %s62 = ssub.s32 %s16, %s35
    %p63 = scmp.eq.s32.totalorder %s62, 0
    %s65 = sadd.s32 %s64, 1
    %s66 = scalar_select %p63, %s64, %s65
    %p69 = pneg %p63
    %p70 = scmp.eq.s32.totalorder %s9, 1
    %p71 = por %p69, %p70
    %p72 = scmp.ne.s32.totalorder %s64, %s67
    %p73 = scmp.eq.s32.totalorder %s9, 0
    %p74 = por %p72, %p73
    %p75 = scmp.ne.s32.totalorder %s64, %s67
    %p76 = scmp.eq.s32.totalorder %s14, 1
    %p77 = por %p75, %p76
    %p78 = scmp.ne.s32.totalorder %s67, %s68
    %p79 = scmp.eq.s32.totalorder %s14, 0
    %p80 = por %p78, %p79
    %p81 = scmp.ne.s32.totalorder %s67, %s68
    %p82 = scmp.eq.s32.totalorder %s15, 1
    %p83 = por %p81, %p82
    %p85 = scmp.ne.s32.totalorder %s68, %s84
    %p86 = scmp.eq.s32.totalorder %s15, 0
    %p87 = por %p85, %p86
    %s88 = ssub.s32 %s16, %s35
    %p89 = scmp.eq.s32.totalorder %s88, 0
    %s91 = sadd.s32 %s90, 1
    %s92 = scalar_select %p89, %s90, %s91
    %p95 = pneg %p89
    %p96 = scmp.eq.s32.totalorder %s9, 1
    %p97 = por %p95, %p96
    %p98 = scmp.ne.s32.totalorder %s90, %s93
    %p99 = scmp.eq.s32.totalorder %s9, 0
    %p100 = por %p98, %p99
    %p101 = scmp.ne.s32.totalorder %s90, %s93
    %p102 = scmp.eq.s32.totalorder %s14, 1
    %p103 = por %p101, %p102
    %p104 = scmp.ne.s32.totalorder %s93, %s94
    %p105 = scmp.eq.s32.totalorder %s14, 0
    %p106 = por %p104, %p105
    %p107 = scmp.ne.s32.totalorder %s93, %s94
    %p108 = scmp.eq.s32.totalorder %s15, 1
    %p109 = por %p107, %p108
    %p111 = scmp.ne.s32.totalorder %s94, %s110
    %p112 = scmp.eq.s32.totalorder %s15, 0
    %p113 = por %p111, %p112
    %s114 = ssub.s32 %s17, %s31
    %s115 = ssub.s32 %s18, %s27
    %s116 = sor.u32 %s114, %s115
    %s117 = ssub.s32 %s16, %s35
    %s118 = sor.u32 %s116, %s117
    %p119 = scmp.eq.s32.totalorder %s118, 0
    %s121 = sadd.s32 %s120, 1
    %s122 = scalar_select %p119, %s120, %s121
    %p125 = pneg %p119
    %p126 = scmp.eq.s32.totalorder %s9, 1
    %p127 = por %p125, %p126
    %p128 = scmp.ne.s32.totalorder %s120, %s123
    %p129 = scmp.eq.s32.totalorder %s9, 0
    %p130 = por %p128, %p129
    %p131 = scmp.ne.s32.totalorder %s120, %s123
    %p132 = scmp.eq.s32.totalorder %s14, 1
    %p133 = por %p131, %p132
    %p134 = scmp.ne.s32.totalorder %s123, %s124
    %p135 = scmp.eq.s32.totalorder %s14, 0
    %p136 = por %p134, %p135
    %p137 = scmp.ne.s32.totalorder %s123, %s124
    %p138 = scmp.eq.s32.totalorder %s15, 1
    %p139 = por %p137, %p138
    %p141 = scmp.ne.s32.totalorder %s124, %s140
    %p142 = scmp.eq.s32.totalorder %s15, 0
    %p143 = por %p141, %p142
    %p144 = scmp.le.s32.totalorder 1, %s9
    %p145 = scmp.lt.s32.totalorder %s9, 3
    %p146 = pnand %p144, %p145
    %p147 = pneg %p146
    // Predicated region
    $region9: #{transposed_upsample.1} parent=5 // pred_check
      _
    $region10: #{transposed_upsample.1} parent=5 // pred_check_branch
      %149 = sbr.rel (%p146) target = $region12
    $region11: #{transposed_upsample.1} parent=5 // pred_region
      %s150 = ssub.s32 %s9, 1
      // Predicated region
      $region13: #{transposed_upsample.1} parent=11 // pred_check
        %p151 = pneg %p80
      $region14: #{transposed_upsample.1} parent=11 // pred_check_branch
        %153 = sbr.rel (%p151) target = $region16
      $region15: #{transposed_upsample.1} parent=11 // pred_region
        %p154 = scmp.lt.s32.totalorder %s19, 0
        %s155 = scalar_select %p154, %s19, 0
        %s156 = smul.addr %s155, 4
        %s157 = scalar_lea.vmem %s1, %s156
      $region16: #{transposed_upsample.1} parent=11 // pred_fallthru
        _
      // Predicated region
      $region17: #{transposed_upsample.1} parent=11 // pred_check
        %p158 = pneg %p106
      $region18: #{transposed_upsample.1} parent=11 // pred_check_branch
        %160 = sbr.rel (%p158) target = $region20
      $region19: #{transposed_upsample.1} parent=11 // pred_region
        %p161 = scmp.lt.s32.totalorder %s19, 0
        %s162 = scalar_select %p161, %s19, 0
        %s163 = scalar_lea.vmem %s2, %s162
      $region20: #{transposed_upsample.1} parent=11 // pred_fallthru
        _
    $region12: #{transposed_upsample.1} parent=5 // pred_fallthru
      _
    %p164 = scmp.lt.s32.totalorder %s9, 2
    // Predicated region
    $region21: #{transposed_upsample.1} parent=5 // pred_check
      %p165 = pneg %p164
    $region22: #{transposed_upsample.1} parent=5 // pred_check_branch
      %167 = sbr.rel (%p165) target = $region24
    $region23: #{transposed_upsample.1} parent=5 // pred_region
      // Predicated region
      $region25: #{transposed_upsample.1} parent=23 // pred_check
        %p168 = pneg %p48
      $region26: #{transposed_upsample.1} parent=23 // pred_check_branch
        %170 = sbr.rel (%p168) target = $region28
      $region27: #{transposed_upsample.1} parent=23 // pred_region
        %p171 = scmp.lt.s32.totalorder %s17, 1
        %s172 = scalar_select %p171, %s17, 1
        %s173 = smul.addr %s172, 104
        %s174 = smul.addr %s173, 8
        %s175 = scalar_lea.vmem %s0, %s174
      $region28: #{transposed_upsample.1} parent=23 // pred_fallthru
        _
    $region24: #{transposed_upsample.1} parent=5 // pred_fallthru
      _
    %p176 = scmp.le.s32.totalorder 1, %s9
    %p177 = scmp.lt.s32.totalorder %s9, 3
    %p178 = pnand %p176, %p177
    %p179 = pneg %p178
    // Predicated region
    $region29: #{transposed_upsample.1} parent=5 // pred_check
      _
    $region30: #{transposed_upsample.1} parent=5 // pred_check_branch
      %181 = sbr.rel (%p178) target = $region32
    $region31: #{transposed_upsample.1} parent=5 // pred_region
      %s182 = ssub.s32 %s9, 1
      %p183 = scmp.lt.s32.totalorder %s20, 1
      %s184 = scalar_select %p183, %s20, 1
      %s185 = smul.addr %s184, 104
      %s186 = smul.addr %s185, 8
      %s187 = scalar_lea.vmem %s0, %s186
      %p188 = pneg %p54
      %p189 = pneg %p51
      %p190 = scmp.lt.s32.totalorder %s19, 0
      %s191 = scalar_select %p190, %s19, 0
      %s192 = smul.addr %s191, 4
      %s193 = scalar_lea.vmem %s1, %s192
      %p194 = pneg %p80
      %p195 = pneg %p77
      %p196 = scmp.lt.s32.totalorder %s19, 0
      %s197 = scalar_select %p196, %s19, 0
      %s198 = scalar_lea.vmem %s2, %s197
      %p199 = pneg %p106
      %p200 = pneg %p103
      %p201 = pneg %p136
      %p202 = pneg %p133
      %s203 = smul.u32 24, %s21
      %p204 = scmp.lt.s32.totalorder %s20, 1
      %s205 = scalar_select %p204, %s20, 1
      %p206 = scmp.lt.s32.totalorder %s203, 23
      %s207 = scalar_select %p206, %s203, 23
      %p208 = scmp.lt.s32.totalorder %s19, 0
      %s209 = scalar_select %p208, %s19, 0
      %s210 = smul.addr %s207, 3
      %s211 = sadd.s32 %s209, %s210
      %s212 = smul.addr %s205, 72
      %s213 = sadd.s32 %s211, %s212
      %s214 = smul.addr %s213, 8
      %s215 = scalar_lea.vmem %s3, %s214
      %p216 = scmp.lt.s32.totalorder %s20, 1
      %s217 = scalar_select %p216, %s20, 1
      %s218 = smul.addr %s217, 104
      %s219 = smul.addr %s218, 8
      %s220 = scalar_lea.vmem %s0, %s219
      %p221 = scmp.lt.s32.totalorder %s19, 0
      %s222 = scalar_select %p221, %s19, 0
      %s223 = smul.addr %s222, 4
      %s224 = scalar_lea.vmem %s1, %s223
      %p225 = scmp.lt.s32.totalorder %s19, 0
      %s226 = scalar_select %p225, %s19, 0
      %s227 = scalar_lea.vmem %s2, %s226
      %s228 = smul.u32 24, %s21
      %p229 = scmp.lt.s32.totalorder %s20, 1
      %s230 = scalar_select %p229, %s20, 1
      %p231 = scmp.lt.s32.totalorder %s228, 23
      %s232 = scalar_select %p231, %s228, 23
      %p233 = scmp.lt.s32.totalorder %s19, 0
      %s234 = scalar_select %p233, %s19, 0
      %s235 = smul.addr %s232, 3
      %s236 = sadd.s32 %s234, %s235
      %s237 = smul.addr %s230, 72
      %s238 = sadd.s32 %s236, %s237
      %s239 = smul.addr %s238, 8
      %s240 = scalar_lea.vmem %s3, %s239
      %s241 = smul.u32 24, %s21
      %s242 = smul.u32 %s21, 24
      %v243 = vld [vmem:[%s227] sm:$0x1]
      loop: start=0, step=1, limit=24
      $region33: #{transposed_upsample.1} parent=31 // loop_pre_header
        _
      $region34: #{transposed_upsample.1} parent=31 // loop_header
        %s245 = sphi 0, %s249
        %p246 = scmp.ge.s32.totalorder %s245, 24
      $region35: #{transposed_upsample.1} parent=31 // loop_header_branch
        %248 = sbr.rel (%p246) target = $region39
      $region36: #{transposed_upsample.1} parent=31 // loop_body
        %s250 = sadd.s32 %s242, %s245
        %s251 = smul.u32 %s250, 32
        %s252 = scalar_lea.vmem %s220, %s251
        %v253 = vld [vmem:[%s252] sm:$0xff]
        %v254 = vld [vmem:[%s252 + $0x8] sm:$0xff]
        %v255 = vld [vmem:[%s252 + $0x10] sm:$0xff]
        %v256 = vld [vmem:[%s252 + $0x18] sm:$0x3]
        %v257 = vld [vmem:[%s224] sm:$0xf]
        %s258 = scalar_lea.vmem %s224, 4
        %v259 = vld [vmem:[%s258] sm:$0xf]
        %vm264 = vcmask 1046528
        %v265 = vrot.slane %v253, 1
        %v266 = vrot.slane %v254, 1
        %v267 = vsel %vm264, %v265, %v266
        %v268 = vrot.slane %v255, 1
        %v269 = vsel %vm264, %v266, %v268
        %v270 = vrot.slane %v256, 1
        %v271 = vsel %vm264, %v268, %v270
        %vm272 = vcmask 31744
        %v273 = vsel %vm272, %v267, 0
        %v275 = vsel %vm272, %v269, 0
        %v277 = vsel %vm272, %v271, 0
        %vm279 = vcmask 1043456
        %v281 = vsel %vm279, %v259, 0
        %283 = vmatprep.subr.mxu0 0.0
        %284 = vmatpush1.msra.mxu0 0.0
        %285 = vmatprep.subr.mxu0 0.0
        %286 = vmatpush1.msra.mxu0 0.0
        %287 = vmatprep.subr.mxu0 0.0
        %288 = vmatpush1.msra.mxu0 0.0
        %289 = vmatprep.subr.mxu0 0.0
        %290 = vmatpush1.msra.mxu0 0.0
        %291 = vmatprep.subr.mxu0 0.0
        %292 = vmatpush1.msra.mxu0 0.0
        %293 = vmatprep.subr.mxu0 0.0
        %294 = vmatpush1.msra.mxu0 0.0
        %295 = vmatprep.subr.mxu0 0.0
        %296 = vmatpush1.msra.mxu0 0.0
        %297 = vmatprep.subr.mxu0 0.0
        %298 = vmatpush1.msra.mxu0 0.0
        %299 = vmatprep.subr.mxu0 0.0
        %300 = vmatpush1.msra.mxu0 0.0
        %301 = vmatprep.subr.mxu0 0.0
        %302 = vmatpush1.msra.mxu0 0.0
        %303 = vmatprep.subr.mxu0 0.0
        %304 = vmatpush1.msra.mxu0 0.0
        %305 = vmatprep.subr.mxu0 0.0
        %306 = vmatpush1.msra.mxu0 0.0
        %307 = vmatprep.subr.mxu0 0.0
        %308 = vmatpush1.msra.mxu0 0.0
        %309 = vmatprep.subr.mxu0 0.0
        %310 = vmatpush1.msra.mxu0 0.0
        %311 = vmatprep.subr.mxu0 0.0
        %312 = vmatpush1.msra.mxu0 0.0
        %313 = vmatprep.subr.mxu0 0.0
        %314 = vmatpush1.msra.mxu0 %v281
        %315 = vmatprep.subr.mxu0 0.0
        %316 = vmatpush2.msra.mxu0 0.0
        %317 = vmatprep.subr.mxu0 0.0
        %318 = vmatpush2.msra.mxu0 0.0
        %319 = vmatprep.subr.mxu0 0.0
        %320 = vmatpush2.msra.mxu0 0.0
        %321 = vmatprep.subr.mxu0 0.0
        %322 = vmatpush2.msra.mxu0 0.0
        %323 = vmatprep.subr.mxu0 0.0
        %324 = vmatpush2.msra.mxu0 0.0
        %325 = vmatprep.subr.mxu0 0.0
        %326 = vmatpush2.msra.mxu0 0.0
        %327 = vmatprep.subr.mxu0 0.0
        %328 = vmatpush2.msra.mxu0 0.0
        %329 = vmatprep.subr.mxu0 0.0
        %330 = vmatpush2.msra.mxu0 0.0
        %331 = vmatprep.subr.mxu0 0.0
        %332 = vmatpush2.msra.mxu0 0.0
        %333 = vmatprep.subr.mxu0 0.0
        %334 = vmatpush2.msra.mxu0 0.0
        %335 = vmatprep.subr.mxu0 0.0
        %336 = vmatpush2.msra.mxu0 0.0
        %337 = vmatprep.subr.mxu0 0.0
        %338 = vmatpush2.msra.mxu0 0.0
        %339 = vmatprep.subr.mxu0 0.0
        %340 = vmatpush2.msra.mxu0 0.0
        %341 = vmatprep.subr.mxu0 0.0
        %342 = vmatpush2.msra.mxu0 0.0
        %343 = vmatprep.subr.mxu0 0.0
        %344 = vmatpush2.msra.mxu0 0.0
        %345 = vmatprep.subr.mxu0 0.0
        %346 = vmatpush2.msra.mxu0 0.0
        %347 = vmatprep.mubr.f32.mxu0 0.0
        %348 = vmatmul.mubr.f32.gmra.mxu0 %v273
        %v349 = vpop.f32.mrf.mxu0
        %v350 = vadd.f32 0.0, %v349
        %v351 = vpop.f32.mrf.mxu0
        %352 = vmatprep.mubr.f32.mxu0 0.0
        %353 = vmatmul.mubr.f32.gmra.mxu0 %v275
        %v354 = vpop.f32.mrf.mxu0
        %v355 = vadd.f32 0.0, %v354
        %v356 = vpop.f32.mrf.mxu0
        %357 = vmatprep.mubr.f32.mxu0 0.0
        %358 = vmatmul.mubr.f32.gmra.mxu0 %v277
        %v359 = vpop.f32.mrf.mxu0
        %v360 = vadd.f32 0.0, %v359
        %v361 = vpop.f32.mrf.mxu0
        %362 = vdwg.mxu0
        %v363 = vsel %vm272, %v253, 0
        %v365 = vsel %vm272, %v254, 0
        %v367 = vsel %vm272, %v255, 0
        %v370 = vsel %vm279, %v257, 0
        %372 = vmatprep.subr.mxu0 0.0
        %373 = vmatpush1.msra.mxu0 0.0
        %374 = vmatprep.subr.mxu0 0.0
        %375 = vmatpush1.msra.mxu0 0.0
        %376 = vmatprep.subr.mxu0 0.0
        %377 = vmatpush1.msra.mxu0 0.0
        %378 = vmatprep.subr.mxu0 0.0
        %379 = vmatpush1.msra.mxu0 0.0
        %380 = vmatprep.subr.mxu0 0.0
        %381 = vmatpush1.msra.mxu0 0.0
        %382 = vmatprep.subr.mxu0 0.0
        %383 = vmatpush1.msra.mxu0 0.0
        %384 = vmatprep.subr.mxu0 0.0
        %385 = vmatpush1.msra.mxu0 0.0
        %386 = vmatprep.subr.mxu0 0.0
        %387 = vmatpush1.msra.mxu0 0.0
        %388 = vmatprep.subr.mxu0 0.0
        %389 = vmatpush1.msra.mxu0 0.0
        %390 = vmatprep.subr.mxu0 0.0
        %391 = vmatpush1.msra.mxu0 0.0
        %392 = vmatprep.subr.mxu0 0.0
        %393 = vmatpush1.msra.mxu0 0.0
        %394 = vmatprep.subr.mxu0 0.0
        %395 = vmatpush1.msra.mxu0 0.0
        %396 = vmatprep.subr.mxu0 0.0
        %397 = vmatpush1.msra.mxu0 0.0
        %398 = vmatprep.subr.mxu0 0.0
        %399 = vmatpush1.msra.mxu0 0.0
        %400 = vmatprep.subr.mxu0 0.0
        %401 = vmatpush1.msra.mxu0 0.0
        %402 = vmatprep.subr.mxu0 0.0
        %403 = vmatpush1.msra.mxu0 %v370
        %404 = vmatprep.subr.mxu0 0.0
        %405 = vmatpush2.msra.mxu0 0.0
        %406 = vmatprep.subr.mxu0 0.0
        %407 = vmatpush2.msra.mxu0 0.0
        %408 = vmatprep.subr.mxu0 0.0
        %409 = vmatpush2.msra.mxu0 0.0
        %410 = vmatprep.subr.mxu0 0.0
        %411 = vmatpush2.msra.mxu0 0.0
        %412 = vmatprep.subr.mxu0 0.0
        %413 = vmatpush2.msra.mxu0 0.0
        %414 = vmatprep.subr.mxu0 0.0
        %415 = vmatpush2.msra.mxu0 0.0
        %416 = vmatprep.subr.mxu0 0.0
        %417 = vmatpush2.msra.mxu0 0.0
        %418 = vmatprep.subr.mxu0 0.0
        %419 = vmatpush2.msra.mxu0 0.0
        %420 = vmatprep.subr.mxu0 0.0
        %421 = vmatpush2.msra.mxu0 0.0
        %422 = vmatprep.subr.mxu0 0.0
        %423 = vmatpush2.msra.mxu0 0.0
        %424 = vmatprep.subr.mxu0 0.0
        %425 = vmatpush2.msra.mxu0 0.0
        %426 = vmatprep.subr.mxu0 0.0
        %427 = vmatpush2.msra.mxu0 0.0
        %428 = vmatprep.subr.mxu0 0.0
        %429 = vmatpush2.msra.mxu0 0.0
        %430 = vmatprep.subr.mxu0 0.0
        %431 = vmatpush2.msra.mxu0 0.0
        %432 = vmatprep.subr.mxu0 0.0
        %433 = vmatpush2.msra.mxu0 0.0
        %434 = vmatprep.subr.mxu0 0.0
        %435 = vmatpush2.msra.mxu0 0.0
        %436 = vmatprep.mubr.f32.mxu0 0.0
        %437 = vmatmul.mubr.f32.gmra.mxu0 %v363
        %v438 = vpop.f32.mrf.mxu0
        %v439 = vadd.f32 %v350, %v438
        %v440 = vpop.f32.mrf.mxu0
        %441 = vmatprep.mubr.f32.mxu0 0.0
        %442 = vmatmul.mubr.f32.gmra.mxu0 %v365
        %v443 = vpop.f32.mrf.mxu0
        %v444 = vadd.f32 %v355, %v443
        %v445 = vpop.f32.mrf.mxu0
        %446 = vmatprep.mubr.f32.mxu0 0.0
        %447 = vmatmul.mubr.f32.gmra.mxu0 %v367
        %v448 = vpop.f32.mrf.mxu0
        %v449 = vadd.f32 %v360, %v448
        %v450 = vpop.f32.mrf.mxu0
        %451 = vdwg.mxu0
        %s452 = scalar_lea.vmem %s224, 8
        %v453 = vld [vmem:[%s452] sm:$0xf]
        %vm454 = vcmask 1045504
        %v455 = vrot.slane %v253, 2
        %v456 = vrot.slane %v254, 2
        %v457 = vsel %vm454, %v455, %v456
        %v458 = vrot.slane %v255, 2
        %v459 = vsel %vm454, %v456, %v458
        %v460 = vrot.slane %v256, 2
        %v461 = vsel %vm454, %v458, %v460
        %v462 = vsel %vm272, %v457, 0
        %v464 = vsel %vm272, %v459, 0
        %v466 = vsel %vm272, %v461, 0
        %v469 = vsel %vm279, %v453, 0
        %471 = vmatprep.subr.mxu0 0.0
        %472 = vmatpush1.msra.mxu0 0.0
        %473 = vmatprep.subr.mxu0 0.0
        %474 = vmatpush1.msra.mxu0 0.0
        %475 = vmatprep.subr.mxu0 0.0
        %476 = vmatpush1.msra.mxu0 0.0
        %477 = vmatprep.subr.mxu0 0.0
        %478 = vmatpush1.msra.mxu0 0.0
        %479 = vmatprep.subr.mxu0 0.0
        %480 = vmatpush1.msra.mxu0 0.0
        %481 = vmatprep.subr.mxu0 0.0
        %482 = vmatpush1.msra.mxu0 0.0
        %483 = vmatprep.subr.mxu0 0.0
        %484 = vmatpush1.msra.mxu0 0.0
        %485 = vmatprep.subr.mxu0 0.0
        %486 = vmatpush1.msra.mxu0 0.0
        %487 = vmatprep.subr.mxu0 0.0
        %488 = vmatpush1.msra.mxu0 0.0
        %489 = vmatprep.subr.mxu0 0.0
        %490 = vmatpush1.msra.mxu0 0.0
        %491 = vmatprep.subr.mxu0 0.0
        %492 = vmatpush1.msra.mxu0 0.0
        %493 = vmatprep.subr.mxu0 0.0
        %494 = vmatpush1.msra.mxu0 0.0
        %495 = vmatprep.subr.mxu0 0.0
        %496 = vmatpush1.msra.mxu0 0.0
        %497 = vmatprep.subr.mxu0 0.0
        %498 = vmatpush1.msra.mxu0 0.0
        %499 = vmatprep.subr.mxu0 0.0
        %500 = vmatpush1.msra.mxu0 0.0
        %501 = vmatprep.subr.mxu0 0.0
        %502 = vmatpush1.msra.mxu0 %v469
        %503 = vmatprep.subr.mxu0 0.0
        %504 = vmatpush2.msra.mxu0 0.0
        %505 = vmatprep.subr.mxu0 0.0
        %506 = vmatpush2.msra.mxu0 0.0
        %507 = vmatprep.subr.mxu0 0.0
        %508 = vmatpush2.msra.mxu0 0.0
        %509 = vmatprep.subr.mxu0 0.0
        %510 = vmatpush2.msra.mxu0 0.0
        %511 = vmatprep.subr.mxu0 0.0
        %512 = vmatpush2.msra.mxu0 0.0
        %513 = vmatprep.subr.mxu0 0.0
        %514 = vmatpush2.msra.mxu0 0.0
        %515 = vmatprep.subr.mxu0 0.0
        %516 = vmatpush2.msra.mxu0 0.0
        %517 = vmatprep.subr.mxu0 0.0
        %518 = vmatpush2.msra.mxu0 0.0
        %519 = vmatprep.subr.mxu0 0.0
        %520 = vmatpush2.msra.mxu0 0.0
        %521 = vmatprep.subr.mxu0 0.0
        %522 = vmatpush2.msra.mxu0 0.0
        %523 = vmatprep.subr.mxu0 0.0
        %524 = vmatpush2.msra.mxu0 0.0
        %525 = vmatprep.subr.mxu0 0.0
        %526 = vmatpush2.msra.mxu0 0.0
        %527 = vmatprep.subr.mxu0 0.0
        %528 = vmatpush2.msra.mxu0 0.0
        %529 = vmatprep.subr.mxu0 0.0
        %530 = vmatpush2.msra.mxu0 0.0
        %531 = vmatprep.subr.mxu0 0.0
        %532 = vmatpush2.msra.mxu0 0.0
        %533 = vmatprep.subr.mxu0 0.0
        %534 = vmatpush2.msra.mxu0 0.0
        %535 = vmatprep.mubr.f32.mxu0 0.0
        %536 = vmatmul.mubr.f32.gmra.mxu0 %v462
        %v537 = vpop.f32.mrf.mxu0
        %v538 = vadd.f32 0.0, %v537
        %v539 = vpop.f32.mrf.mxu0
        %540 = vmatprep.mubr.f32.mxu0 0.0
        %541 = vmatmul.mubr.f32.gmra.mxu0 %v464
        %v542 = vpop.f32.mrf.mxu0
        %v543 = vadd.f32 0.0, %v542
        %v544 = vpop.f32.mrf.mxu0
        %545 = vmatprep.mubr.f32.mxu0 0.0
        %546 = vmatmul.mubr.f32.gmra.mxu0 %v466
        %v547 = vpop.f32.mrf.mxu0
        %v548 = vadd.f32 0.0, %v547
        %v549 = vpop.f32.mrf.mxu0
        %550 = vdwg.mxu0
        %v551 = vadd.f32 %v439, %v538
        %v552 = vadd.f32 %v444, %v543
        %v553 = vadd.f32 %v449, %v548
        %s554 = sadd.s32 %s250, 1
        %s555 = smul.u32 %s554, 32
        %s556 = scalar_lea.vmem %s220, %s555
        %v557 = vld [vmem:[%s556] sm:$0xff]
        %v558 = vld [vmem:[%s556 + $0x8] sm:$0xff]
        %v559 = vld [vmem:[%s556 + $0x10] sm:$0xff]
        %v560 = vld [vmem:[%s556 + $0x18] sm:$0x3]
        %s561 = scalar_lea.vmem %s224, 12
        %v562 = vld [vmem:[%s561] sm:$0xf]
        %v564 = vsel %vm272, %v557, 0
        %v567 = vsel %vm272, %v558, 0
        %v570 = vsel %vm272, %v559, 0
        %v573 = vsel %vm279, %v562, 0
        %575 = vmatprep.subr.mxu0 0.0
        %576 = vmatpush1.msra.mxu0 0.0
        %577 = vmatprep.subr.mxu0 0.0
        %578 = vmatpush1.msra.mxu0 0.0
        %579 = vmatprep.subr.mxu0 0.0
        %580 = vmatpush1.msra.mxu0 0.0
        %581 = vmatprep.subr.mxu0 0.0
        %582 = vmatpush1.msra.mxu0 0.0
        %583 = vmatprep.subr.mxu0 0.0
        %584 = vmatpush1.msra.mxu0 0.0
        %585 = vmatprep.subr.mxu0 0.0
        %586 = vmatpush1.msra.mxu0 0.0
        %587 = vmatprep.subr.mxu0 0.0
        %588 = vmatpush1.msra.mxu0 0.0
        %589 = vmatprep.subr.mxu0 0.0
        %590 = vmatpush1.msra.mxu0 0.0
        %591 = vmatprep.subr.mxu0 0.0
        %592 = vmatpush1.msra.mxu0 0.0
        %593 = vmatprep.subr.mxu0 0.0
        %594 = vmatpush1.msra.mxu0 0.0
        %595 = vmatprep.subr.mxu0 0.0
        %596 = vmatpush1.msra.mxu0 0.0
        %597 = vmatprep.subr.mxu0 0.0
        %598 = vmatpush1.msra.mxu0 0.0
        %599 = vmatprep.subr.mxu0 0.0
        %600 = vmatpush1.msra.mxu0 0.0
        %601 = vmatprep.subr.mxu0 0.0
        %602 = vmatpush1.msra.mxu0 0.0
        %603 = vmatprep.subr.mxu0 0.0
        %604 = vmatpush1.msra.mxu0 0.0
        %605 = vmatprep.subr.mxu0 0.0
        %606 = vmatpush1.msra.mxu0 %v573
        %607 = vmatprep.subr.mxu0 0.0
        %608 = vmatpush2.msra.mxu0 0.0
        %609 = vmatprep.subr.mxu0 0.0
        %610 = vmatpush2.msra.mxu0 0.0
        %611 = vmatprep.subr.mxu0 0.0
        %612 = vmatpush2.msra.mxu0 0.0
        %613 = vmatprep.subr.mxu0 0.0
        %614 = vmatpush2.msra.mxu0 0.0
        %615 = vmatprep.subr.mxu0 0.0
        %616 = vmatpush2.msra.mxu0 0.0
        %617 = vmatprep.subr.mxu0 0.0
        %618 = vmatpush2.msra.mxu0 0.0
        %619 = vmatprep.subr.mxu0 0.0
        %620 = vmatpush2.msra.mxu0 0.0
        %621 = vmatprep.subr.mxu0 0.0
        %622 = vmatpush2.msra.mxu0 0.0
        %623 = vmatprep.subr.mxu0 0.0
        %624 = vmatpush2.msra.mxu0 0.0
        %625 = vmatprep.subr.mxu0 0.0
        %626 = vmatpush2.msra.mxu0 0.0
        %627 = vmatprep.subr.mxu0 0.0
        %628 = vmatpush2.msra.mxu0 0.0
        %629 = vmatprep.subr.mxu0 0.0
        %630 = vmatpush2.msra.mxu0 0.0
        %631 = vmatprep.subr.mxu0 0.0
        %632 = vmatpush2.msra.mxu0 0.0
        %633 = vmatprep.subr.mxu0 0.0
        %634 = vmatpush2.msra.mxu0 0.0
        %635 = vmatprep.subr.mxu0 0.0
        %636 = vmatpush2.msra.mxu0 0.0
        %637 = vmatprep.subr.mxu0 0.0
        %638 = vmatpush2.msra.mxu0 0.0
        %639 = vmatprep.mubr.f32.mxu0 0.0
        %640 = vmatmul.mubr.f32.gmra.mxu0 %v564
        %v641 = vpop.f32.mrf.mxu0
        %v642 = vadd.f32 0.0, %v641
        %v643 = vpop.f32.mrf.mxu0
        %644 = vmatprep.mubr.f32.mxu0 0.0
        %645 = vmatmul.mubr.f32.gmra.mxu0 %v567
        %v646 = vpop.f32.mrf.mxu0
        %v647 = vadd.f32 0.0, %v646
        %v648 = vpop.f32.mrf.mxu0
        %649 = vmatprep.mubr.f32.mxu0 0.0
        %650 = vmatmul.mubr.f32.gmra.mxu0 %v570
        %v651 = vpop.f32.mrf.mxu0
        %v652 = vadd.f32 0.0, %v651
        %v653 = vpop.f32.mrf.mxu0
        %654 = vdwg.mxu0
        %v655 = vadd.f32 %v551, %v642
        %v656 = vadd.f32 %v552, %v647
        %v657 = vadd.f32 %v553, %v652
        %s658 = scalar_lea.vmem %s224, 16
        %v659 = vld [vmem:[%s658] sm:$0xf]
        %v661 = vrot.slane %v557, 1
        %v662 = vrot.slane %v558, 1
        %v663 = vsel %vm264, %v661, %v662
        %v664 = vrot.slane %v559, 1
        %v665 = vsel %vm264, %v662, %v664
        %v666 = vrot.slane %v560, 1
        %v667 = vsel %vm264, %v664, %v666
        %v668 = vsel %vm272, %v663, 0
        %v670 = vsel %vm272, %v665, 0
        %v672 = vsel %vm272, %v667, 0
        %v675 = vsel %vm279, %v659, 0
        %677 = vmatprep.subr.mxu0 0.0
        %678 = vmatpush1.msra.mxu0 0.0
        %679 = vmatprep.subr.mxu0 0.0
        %680 = vmatpush1.msra.mxu0 0.0
        %681 = vmatprep.subr.mxu0 0.0
        %682 = vmatpush1.msra.mxu0 0.0
        %683 = vmatprep.subr.mxu0 0.0
        %684 = vmatpush1.msra.mxu0 0.0
        %685 = vmatprep.subr.mxu0 0.0
        %686 = vmatpush1.msra.mxu0 0.0
        %687 = vmatprep.subr.mxu0 0.0
        %688 = vmatpush1.msra.mxu0 0.0
        %689 = vmatprep.subr.mxu0 0.0
        %690 = vmatpush1.msra.mxu0 0.0
        %691 = vmatprep.subr.mxu0 0.0
        %692 = vmatpush1.msra.mxu0 0.0
        %693 = vmatprep.subr.mxu0 0.0
        %694 = vmatpush1.msra.mxu0 0.0
        %695 = vmatprep.subr.mxu0 0.0
        %696 = vmatpush1.msra.mxu0 0.0
        %697 = vmatprep.subr.mxu0 0.0
        %698 = vmatpush1.msra.mxu0 0.0
        %699 = vmatprep.subr.mxu0 0.0
        %700 = vmatpush1.msra.mxu0 0.0
        %701 = vmatprep.subr.mxu0 0.0
        %702 = vmatpush1.msra.mxu0 0.0
        %703 = vmatprep.subr.mxu0 0.0
        %704 = vmatpush1.msra.mxu0 0.0
        %705 = vmatprep.subr.mxu0 0.0
        %706 = vmatpush1.msra.mxu0 0.0
        %707 = vmatprep.subr.mxu0 0.0
        %708 = vmatpush1.msra.mxu0 %v675
        %709 = vmatprep.subr.mxu0 0.0
        %710 = vmatpush2.msra.mxu0 0.0
        %711 = vmatprep.subr.mxu0 0.0
        %712 = vmatpush2.msra.mxu0 0.0
        %713 = vmatprep.subr.mxu0 0.0
        %714 = vmatpush2.msra.mxu0 0.0
        %715 = vmatprep.subr.mxu0 0.0
        %716 = vmatpush2.msra.mxu0 0.0
        %717 = vmatprep.subr.mxu0 0.0
        %718 = vmatpush2.msra.mxu0 0.0
        %719 = vmatprep.subr.mxu0 0.0
        %720 = vmatpush2.msra.mxu0 0.0
        %721 = vmatprep.subr.mxu0 0.0
        %722 = vmatpush2.msra.mxu0 0.0
        %723 = vmatprep.subr.mxu0 0.0
        %724 = vmatpush2.msra.mxu0 0.0
        %725 = vmatprep.subr.mxu0 0.0
        %726 = vmatpush2.msra.mxu0 0.0
        %727 = vmatprep.subr.mxu0 0.0
        %728 = vmatpush2.msra.mxu0 0.0
        %729 = vmatprep.subr.mxu0 0.0
        %730 = vmatpush2.msra.mxu0 0.0
        %731 = vmatprep.subr.mxu0 0.0
        %732 = vmatpush2.msra.mxu0 0.0
        %733 = vmatprep.subr.mxu0 0.0
        %734 = vmatpush2.msra.mxu0 0.0
        %735 = vmatprep.subr.mxu0 0.0
        %736 = vmatpush2.msra.mxu0 0.0
        %737 = vmatprep.subr.mxu0 0.0
        %738 = vmatpush2.msra.mxu0 0.0
        %739 = vmatprep.subr.mxu0 0.0
        %740 = vmatpush2.msra.mxu0 0.0
        %741 = vmatprep.mubr.f32.mxu0 0.0
        %742 = vmatmul.mubr.f32.gmra.mxu0 %v668
        %v743 = vpop.f32.mrf.mxu0
        %v744 = vadd.f32 0.0, %v743
        %v745 = vpop.f32.mrf.mxu0
        %746 = vmatprep.mubr.f32.mxu0 0.0
        %747 = vmatmul.mubr.f32.gmra.mxu0 %v670
        %v748 = vpop.f32.mrf.mxu0
        %v749 = vadd.f32 0.0, %v748
        %v750 = vpop.f32.mrf.mxu0
        %751 = vmatprep.mubr.f32.mxu0 0.0
        %752 = vmatmul.mubr.f32.gmra.mxu0 %v672
        %v753 = vpop.f32.mrf.mxu0
        %v754 = vadd.f32 0.0, %v753
        %v755 = vpop.f32.mrf.mxu0
        %756 = vdwg.mxu0
        %v757 = vadd.f32 %v655, %v744
        %v758 = vadd.f32 %v656, %v749
        %v759 = vadd.f32 %v657, %v754
        %s760 = scalar_lea.vmem %s224, 20
        %v761 = vld [vmem:[%s760] sm:$0xf]
        %v762 = vrot.slane %v557, 2
        %v763 = vrot.slane %v558, 2
        %v764 = vsel %vm454, %v762, %v763
        %v765 = vrot.slane %v559, 2
        %v766 = vsel %vm454, %v763, %v765
        %v767 = vrot.slane %v560, 2
        %v768 = vsel %vm454, %v765, %v767
        %v769 = vsel %vm272, %v764, 0
        %v771 = vsel %vm272, %v766, 0
        %v773 = vsel %vm272, %v768, 0
        %v776 = vsel %vm279, %v761, 0
        %778 = vmatprep.subr.mxu0 0.0
        %779 = vmatpush1.msra.mxu0 0.0
        %780 = vmatprep.subr.mxu0 0.0
        %781 = vmatpush1.msra.mxu0 0.0
        %782 = vmatprep.subr.mxu0 0.0
        %783 = vmatpush1.msra.mxu0 0.0
        %784 = vmatprep.subr.mxu0 0.0
        %785 = vmatpush1.msra.mxu0 0.0
        %786 = vmatprep.subr.mxu0 0.0
        %787 = vmatpush1.msra.mxu0 0.0
        %788 = vmatprep.subr.mxu0 0.0
        %789 = vmatpush1.msra.mxu0 0.0
        %790 = vmatprep.subr.mxu0 0.0
        %791 = vmatpush1.msra.mxu0 0.0
        %792 = vmatprep.subr.mxu0 0.0
        %793 = vmatpush1.msra.mxu0 0.0
        %794 = vmatprep.subr.mxu0 0.0
        %795 = vmatpush1.msra.mxu0 0.0
        %796 = vmatprep.subr.mxu0 0.0
        %797 = vmatpush1.msra.mxu0 0.0
        %798 = vmatprep.subr.mxu0 0.0
        %799 = vmatpush1.msra.mxu0 0.0
        %800 = vmatprep.subr.mxu0 0.0
        %801 = vmatpush1.msra.mxu0 0.0
        %802 = vmatprep.subr.mxu0 0.0
        %803 = vmatpush1.msra.mxu0 0.0
        %804 = vmatprep.subr.mxu0 0.0
        %805 = vmatpush1.msra.mxu0 0.0
        %806 = vmatprep.subr.mxu0 0.0
        %807 = vmatpush1.msra.mxu0 0.0
        %808 = vmatprep.subr.mxu0 0.0
        %809 = vmatpush1.msra.mxu0 %v776
        %810 = vmatprep.subr.mxu0 0.0
        %811 = vmatpush2.msra.mxu0 0.0
        %812 = vmatprep.subr.mxu0 0.0
        %813 = vmatpush2.msra.mxu0 0.0
        %814 = vmatprep.subr.mxu0 0.0
        %815 = vmatpush2.msra.mxu0 0.0
        %816 = vmatprep.subr.mxu0 0.0
        %817 = vmatpush2.msra.mxu0 0.0
        %818 = vmatprep.subr.mxu0 0.0
        %819 = vmatpush2.msra.mxu0 0.0
        %820 = vmatprep.subr.mxu0 0.0
        %821 = vmatpush2.msra.mxu0 0.0
        %822 = vmatprep.subr.mxu0 0.0
        %823 = vmatpush2.msra.mxu0 0.0
        %824 = vmatprep.subr.mxu0 0.0
        %825 = vmatpush2.msra.mxu0 0.0
        %826 = vmatprep.subr.mxu0 0.0
        %827 = vmatpush2.msra.mxu0 0.0
        %828 = vmatprep.subr.mxu0 0.0
        %829 = vmatpush2.msra.mxu0 0.0
        %830 = vmatprep.subr.mxu0 0.0
        %831 = vmatpush2.msra.mxu0 0.0
        %832 = vmatprep.subr.mxu0 0.0
        %833 = vmatpush2.msra.mxu0 0.0
        %834 = vmatprep.subr.mxu0 0.0
        %835 = vmatpush2.msra.mxu0 0.0
        %836 = vmatprep.subr.mxu0 0.0
        %837 = vmatpush2.msra.mxu0 0.0
        %838 = vmatprep.subr.mxu0 0.0
        %839 = vmatpush2.msra.mxu0 0.0
        %840 = vmatprep.subr.mxu0 0.0
        %841 = vmatpush2.msra.mxu0 0.0
        %842 = vmatprep.mubr.f32.mxu0 0.0
        %843 = vmatmul.mubr.f32.gmra.mxu0 %v769
        %v844 = vpop.f32.mrf.mxu0
        %v845 = vadd.f32 0.0, %v844
        %v846 = vpop.f32.mrf.mxu0
        %847 = vmatprep.mubr.f32.mxu0 0.0
        %848 = vmatmul.mubr.f32.gmra.mxu0 %v771
        %v849 = vpop.f32.mrf.mxu0
        %v850 = vadd.f32 0.0, %v849
        %v851 = vpop.f32.mrf.mxu0
        %852 = vmatprep.mubr.f32.mxu0 0.0
        %853 = vmatmul.mubr.f32.gmra.mxu0 %v773
        %v854 = vpop.f32.mrf.mxu0
        %v855 = vadd.f32 0.0, %v854
        %v856 = vpop.f32.mrf.mxu0
        %857 = vdwg.mxu0
        %v858 = vadd.f32 %v757, %v845
        %v859 = vadd.f32 %v758, %v850
        %v860 = vadd.f32 %v759, %v855
        %s861 = sadd.s32 %s250, 2
        %s862 = smul.u32 %s861, 32
        %s863 = scalar_lea.vmem %s220, %s862
        %v864 = vld [vmem:[%s863] sm:$0xff]
        %v865 = vld [vmem:[%s863 + $0x8] sm:$0xff]
        %v866 = vld [vmem:[%s863 + $0x10] sm:$0xff]
        %v867 = vld [vmem:[%s863 + $0x18] sm:$0x3]
        %s868 = scalar_lea.vmem %s224, 24
        %v869 = vld [vmem:[%s868] sm:$0xf]
        %v871 = vsel %vm272, %v864, 0
        %v874 = vsel %vm272, %v865, 0
        %v877 = vsel %vm272, %v866, 0
        %v880 = vsel %vm279, %v869, 0
        %882 = vmatprep.subr.mxu0 0.0
        %883 = vmatpush1.msra.mxu0 0.0
        %884 = vmatprep.subr.mxu0 0.0
        %885 = vmatpush1.msra.mxu0 0.0
        %886 = vmatprep.subr.mxu0 0.0
        %887 = vmatpush1.msra.mxu0 0.0
        %888 = vmatprep.subr.mxu0 0.0
        %889 = vmatpush1.msra.mxu0 0.0
        %890 = vmatprep.subr.mxu0 0.0
        %891 = vmatpush1.msra.mxu0 0.0
        %892 = vmatprep.subr.mxu0 0.0
        %893 = vmatpush1.msra.mxu0 0.0
        %894 = vmatprep.subr.mxu0 0.0
        %895 = vmatpush1.msra.mxu0 0.0
        %896 = vmatprep.subr.mxu0 0.0
        %897 = vmatpush1.msra.mxu0 0.0
        %898 = vmatprep.subr.mxu0 0.0
        %899 = vmatpush1.msra.mxu0 0.0
        %900 = vmatprep.subr.mxu0 0.0
        %901 = vmatpush1.msra.mxu0 0.0
        %902 = vmatprep.subr.mxu0 0.0
        %903 = vmatpush1.msra.mxu0 0.0
        %904 = vmatprep.subr.mxu0 0.0
        %905 = vmatpush1.msra.mxu0 0.0
        %906 = vmatprep.subr.mxu0 0.0
        %907 = vmatpush1.msra.mxu0 0.0
        %908 = vmatprep.subr.mxu0 0.0
        %909 = vmatpush1.msra.mxu0 0.0
        %910 = vmatprep.subr.mxu0 0.0
        %911 = vmatpush1.msra.mxu0 0.0
        %912 = vmatprep.subr.mxu0 0.0
        %913 = vmatpush1.msra.mxu0 %v880
        %914 = vmatprep.subr.mxu0 0.0
        %915 = vmatpush2.msra.mxu0 0.0
        %916 = vmatprep.subr.mxu0 0.0
        %917 = vmatpush2.msra.mxu0 0.0
        %918 = vmatprep.subr.mxu0 0.0
        %919 = vmatpush2.msra.mxu0 0.0
        %920 = vmatprep.subr.mxu0 0.0
        %921 = vmatpush2.msra.mxu0 0.0
        %922 = vmatprep.subr.mxu0 0.0
        %923 = vmatpush2.msra.mxu0 0.0
        %924 = vmatprep.subr.mxu0 0.0
        %925 = vmatpush2.msra.mxu0 0.0
        %926 = vmatprep.subr.mxu0 0.0
        %927 = vmatpush2.msra.mxu0 0.0
        %928 = vmatprep.subr.mxu0 0.0
        %929 = vmatpush2.msra.mxu0 0.0
        %930 = vmatprep.subr.mxu0 0.0
        %931 = vmatpush2.msra.mxu0 0.0
        %932 = vmatprep.subr.mxu0 0.0
        %933 = vmatpush2.msra.mxu0 0.0
        %934 = vmatprep.subr.mxu0 0.0
        %935 = vmatpush2.msra.mxu0 0.0
        %936 = vmatprep.subr.mxu0 0.0
        %937 = vmatpush2.msra.mxu0 0.0
        %938 = vmatprep.subr.mxu0 0.0
        %939 = vmatpush2.msra.mxu0 0.0
        %940 = vmatprep.subr.mxu0 0.0
        %941 = vmatpush2.msra.mxu0 0.0
        %942 = vmatprep.subr.mxu0 0.0
        %943 = vmatpush2.msra.mxu0 0.0
        %944 = vmatprep.subr.mxu0 0.0
        %945 = vmatpush2.msra.mxu0 0.0
        %946 = vmatprep.mubr.f32.mxu0 0.0
        %947 = vmatmul.mubr.f32.gmra.mxu0 %v871
        %v948 = vpop.f32.mrf.mxu0
        %v949 = vadd.f32 0.0, %v948
        %v950 = vpop.f32.mrf.mxu0
        %951 = vmatprep.mubr.f32.mxu0 0.0
        %952 = vmatmul.mubr.f32.gmra.mxu0 %v874
        %v953 = vpop.f32.mrf.mxu0
        %v954 = vadd.f32 0.0, %v953
        %v955 = vpop.f32.mrf.mxu0
        %956 = vmatprep.mubr.f32.mxu0 0.0
        %957 = vmatmul.mubr.f32.gmra.mxu0 %v877
        %v958 = vpop.f32.mrf.mxu0
        %v959 = vadd.f32 0.0, %v958
        %v960 = vpop.f32.mrf.mxu0
        %961 = vdwg.mxu0
        %v962 = vadd.f32 %v858, %v949
        %v963 = vadd.f32 %v859, %v954
        %v964 = vadd.f32 %v860, %v959
        %s965 = scalar_lea.vmem %s224, 28
        %v966 = vld [vmem:[%s965] sm:$0xf]
        %v968 = vrot.slane %v864, 1
        %v969 = vrot.slane %v865, 1
        %v970 = vsel %vm264, %v968, %v969
        %v971 = vrot.slane %v866, 1
        %v972 = vsel %vm264, %v969, %v971
        %v973 = vrot.slane %v867, 1
        %v974 = vsel %vm264, %v971, %v973
        %v975 = vsel %vm272, %v970, 0
        %v977 = vsel %vm272, %v972, 0
        %v979 = vsel %vm272, %v974, 0
        %v982 = vsel %vm279, %v966, 0
        %984 = vmatprep.subr.mxu0 0.0
        %985 = vmatpush1.msra.mxu0 0.0
        %986 = vmatprep.subr.mxu0 0.0
        %987 = vmatpush1.msra.mxu0 0.0
        %988 = vmatprep.subr.mxu0 0.0
        %989 = vmatpush1.msra.mxu0 0.0
        %990 = vmatprep.subr.mxu0 0.0
        %991 = vmatpush1.msra.mxu0 0.0
        %992 = vmatprep.subr.mxu0 0.0
        %993 = vmatpush1.msra.mxu0 0.0
        %994 = vmatprep.subr.mxu0 0.0
        %995 = vmatpush1.msra.mxu0 0.0
        %996 = vmatprep.subr.mxu0 0.0
        %997 = vmatpush1.msra.mxu0 0.0
        %998 = vmatprep.subr.mxu0 0.0
        %999 = vmatpush1.msra.mxu0 0.0
        %1000 = vmatprep.subr.mxu0 0.0
        %1001 = vmatpush1.msra.mxu0 0.0
        %1002 = vmatprep.subr.mxu0 0.0
        %1003 = vmatpush1.msra.mxu0 0.0
        %1004 = vmatprep.subr.mxu0 0.0
        %1005 = vmatpush1.msra.mxu0 0.0
        %1006 = vmatprep.subr.mxu0 0.0
        %1007 = vmatpush1.msra.mxu0 0.0
        %1008 = vmatprep.subr.mxu0 0.0
        %1009 = vmatpush1.msra.mxu0 0.0
        %1010 = vmatprep.subr.mxu0 0.0
        %1011 = vmatpush1.msra.mxu0 0.0
        %1012 = vmatprep.subr.mxu0 0.0
        %1013 = vmatpush1.msra.mxu0 0.0
        %1014 = vmatprep.subr.mxu0 0.0
        %1015 = vmatpush1.msra.mxu0 %v982
        %1016 = vmatprep.subr.mxu0 0.0
        %1017 = vmatpush2.msra.mxu0 0.0
        %1018 = vmatprep.subr.mxu0 0.0
        %1019 = vmatpush2.msra.mxu0 0.0
        %1020 = vmatprep.subr.mxu0 0.0
        %1021 = vmatpush2.msra.mxu0 0.0
        %1022 = vmatprep.subr.mxu0 0.0
        %1023 = vmatpush2.msra.mxu0 0.0
        %1024 = vmatprep.subr.mxu0 0.0
        %1025 = vmatpush2.msra.mxu0 0.0
        %1026 = vmatprep.subr.mxu0 0.0
        %1027 = vmatpush2.msra.mxu0 0.0
        %1028 = vmatprep.subr.mxu0 0.0
        %1029 = vmatpush2.msra.mxu0 0.0
        %1030 = vmatprep.subr.mxu0 0.0
        %1031 = vmatpush2.msra.mxu0 0.0
        %1032 = vmatprep.subr.mxu0 0.0
        %1033 = vmatpush2.msra.mxu0 0.0
        %1034 = vmatprep.subr.mxu0 0.0
        %1035 = vmatpush2.msra.mxu0 0.0
        %1036 = vmatprep.subr.mxu0 0.0
        %1037 = vmatpush2.msra.mxu0 0.0
        %1038 = vmatprep.subr.mxu0 0.0
        %1039 = vmatpush2.msra.mxu0 0.0
        %1040 = vmatprep.subr.mxu0 0.0
        %1041 = vmatpush2.msra.mxu0 0.0
        %1042 = vmatprep.subr.mxu0 0.0
        %1043 = vmatpush2.msra.mxu0 0.0
        %1044 = vmatprep.subr.mxu0 0.0
        %1045 = vmatpush2.msra.mxu0 0.0
        %1046 = vmatprep.subr.mxu0 0.0
        %1047 = vmatpush2.msra.mxu0 0.0
        %1048 = vmatprep.mubr.f32.mxu0 0.0
        %1049 = vmatmul.mubr.f32.gmra.mxu0 %v975
        %v1050 = vpop.f32.mrf.mxu0
        %v1051 = vadd.f32 0.0, %v1050
        %v1052 = vpop.f32.mrf.mxu0
        %1053 = vmatprep.mubr.f32.mxu0 0.0
        %1054 = vmatmul.mubr.f32.gmra.mxu0 %v977
        %v1055 = vpop.f32.mrf.mxu0
        %v1056 = vadd.f32 0.0, %v1055
        %v1057 = vpop.f32.mrf.mxu0
        %1058 = vmatprep.mubr.f32.mxu0 0.0
        %1059 = vmatmul.mubr.f32.gmra.mxu0 %v979
        %v1060 = vpop.f32.mrf.mxu0
        %v1061 = vadd.f32 0.0, %v1060
        %v1062 = vpop.f32.mrf.mxu0
        %1063 = vdwg.mxu0
        %v1064 = vadd.f32 %v962, %v1051
        %v1065 = vadd.f32 %v963, %v1056
        %v1066 = vadd.f32 %v964, %v1061
        %s1067 = scalar_lea.vmem %s224, 32
        %v1068 = vld [vmem:[%s1067] sm:$0xf]
        %v1069 = vrot.slane %v864, 2
        %v1070 = vrot.slane %v865, 2
        %v1071 = vsel %vm454, %v1069, %v1070
        %v1072 = vrot.slane %v866, 2
        %v1073 = vsel %vm454, %v1070, %v1072
        %v1074 = vrot.slane %v867, 2
        %v1075 = vsel %vm454, %v1072, %v1074
        %v1076 = vsel %vm272, %v1071, 0
        %v1078 = vsel %vm272, %v1073, 0
        %v1080 = vsel %vm272, %v1075, 0
        %v1083 = vsel %vm279, %v1068, 0
        %1085 = vmatprep.subr.mxu0 0.0
        %1086 = vmatpush1.msra.mxu0 0.0
        %1087 = vmatprep.subr.mxu0 0.0
        %1088 = vmatpush1.msra.mxu0 0.0
        %1089 = vmatprep.subr.mxu0 0.0
        %1090 = vmatpush1.msra.mxu0 0.0
        %1091 = vmatprep.subr.mxu0 0.0
        %1092 = vmatpush1.msra.mxu0 0.0
        %1093 = vmatprep.subr.mxu0 0.0
        %1094 = vmatpush1.msra.mxu0 0.0
        %1095 = vmatprep.subr.mxu0 0.0
        %1096 = vmatpush1.msra.mxu0 0.0
        %1097 = vmatprep.subr.mxu0 0.0
        %1098 = vmatpush1.msra.mxu0 0.0
        %1099 = vmatprep.subr.mxu0 0.0
        %1100 = vmatpush1.msra.mxu0 0.0
        %1101 = vmatprep.subr.mxu0 0.0
        %1102 = vmatpush1.msra.mxu0 0.0
        %1103 = vmatprep.subr.mxu0 0.0
        %1104 = vmatpush1.msra.mxu0 0.0
        %1105 = vmatprep.subr.mxu0 0.0
        %1106 = vmatpush1.msra.mxu0 0.0
        %1107 = vmatprep.subr.mxu0 0.0
        %1108 = vmatpush1.msra.mxu0 0.0
        %1109 = vmatprep.subr.mxu0 0.0
        %1110 = vmatpush1.msra.mxu0 0.0
        %1111 = vmatprep.subr.mxu0 0.0
        %1112 = vmatpush1.msra.mxu0 0.0
        %1113 = vmatprep.subr.mxu0 0.0
        %1114 = vmatpush1.msra.mxu0 0.0
        %1115 = vmatprep.subr.mxu0 0.0
        %1116 = vmatpush1.msra.mxu0 %v1083
        %1117 = vmatprep.subr.mxu0 0.0
        %1118 = vmatpush2.msra.mxu0 0.0
        %1119 = vmatprep.subr.mxu0 0.0
        %1120 = vmatpush2.msra.mxu0 0.0
        %1121 = vmatprep.subr.mxu0 0.0
        %1122 = vmatpush2.msra.mxu0 0.0
        %1123 = vmatprep.subr.mxu0 0.0
        %1124 = vmatpush2.msra.mxu0 0.0
        %1125 = vmatprep.subr.mxu0 0.0
        %1126 = vmatpush2.msra.mxu0 0.0
        %1127 = vmatprep.subr.mxu0 0.0
        %1128 = vmatpush2.msra.mxu0 0.0
        %1129 = vmatprep.subr.mxu0 0.0
        %1130 = vmatpush2.msra.mxu0 0.0
        %1131 = vmatprep.subr.mxu0 0.0
        %1132 = vmatpush2.msra.mxu0 0.0
        %1133 = vmatprep.subr.mxu0 0.0
        %1134 = vmatpush2.msra.mxu0 0.0
        %1135 = vmatprep.subr.mxu0 0.0
        %1136 = vmatpush2.msra.mxu0 0.0
        %1137 = vmatprep.subr.mxu0 0.0
        %1138 = vmatpush2.msra.mxu0 0.0
        %1139 = vmatprep.subr.mxu0 0.0
        %1140 = vmatpush2.msra.mxu0 0.0
        %1141 = vmatprep.subr.mxu0 0.0
        %1142 = vmatpush2.msra.mxu0 0.0
        %1143 = vmatprep.subr.mxu0 0.0
        %1144 = vmatpush2.msra.mxu0 0.0
        %1145 = vmatprep.subr.mxu0 0.0
        %1146 = vmatpush2.msra.mxu0 0.0
        %1147 = vmatprep.subr.mxu0 0.0
        %1148 = vmatpush2.msra.mxu0 0.0
        %1149 = vmatprep.mubr.f32.mxu0 0.0
        %1150 = vmatmul.mubr.f32.gmra.mxu0 %v1076
        %v1151 = vpop.f32.mrf.mxu0
        %v1152 = vadd.f32 0.0, %v1151
        %v1153 = vpop.f32.mrf.mxu0
        %1154 = vmatprep.mubr.f32.mxu0 0.0
        %1155 = vmatmul.mubr.f32.gmra.mxu0 %v1078
        %v1156 = vpop.f32.mrf.mxu0
        %v1157 = vadd.f32 0.0, %v1156
        %v1158 = vpop.f32.mrf.mxu0
        %1159 = vmatprep.mubr.f32.mxu0 0.0
        %1160 = vmatmul.mubr.f32.gmra.mxu0 %v1080
        %v1161 = vpop.f32.mrf.mxu0
        %v1162 = vadd.f32 0.0, %v1161
        %v1163 = vpop.f32.mrf.mxu0
        %1164 = vdwg.mxu0
        %v1165 = vadd.f32 %v1064, %v1152
        %v1166 = vadd.f32 %v1065, %v1157
        %v1167 = vadd.f32 %v1066, %v1162
        %v1169 = vlaneseq
        %v1170 = vshrl.u32 %v1169, 7
        %v1171 = vsub.s32 0, %v1170
        %v1172 = vrot.slane %v243, %v1171
        %v1174 = vadd.f32 %v1165, %v1172
        %v1175 = vadd.f32 %v1166, %v1172
        %v1176 = vadd.f32 %v1167, %v1172
        %s1177 = smul.u32 %s245, 24
        %s1178 = scalar_lea.vmem %s240, %s1177
        %vm1179 = vcmask 130048
        %1180 = vst.msk [vmem:[%s1178] sm:$0xff] %vm1179, %v1174
        %1181 = vst.msk [vmem:[%s1178 + $0x8] sm:$0xff] %vm1179, %v1175
        %1182 = vst.msk [vmem:[%s1178 + $0x10] sm:$0xff] %vm1179, %v1176
      $region37: #{transposed_upsample.1} parent=31 // loop_footer
        %s249 = sadd.s32 1, %s245
      $region38: #{transposed_upsample.1} parent=31 // loop_footer_branch
        %244 = sbr.rel target = $region34
      $region39: #{transposed_upsample.1} parent=31 // loop_exit
        _
      %s1183 = smul.u32 24, %s21
      %p1184 = scmp.lt.s32.totalorder %s20, 1
      %s1185 = scalar_select %p1184, %s20, 1
      %p1186 = scmp.lt.s32.totalorder %s1183, 23
      %s1187 = scalar_select %p1186, %s1183, 23
      %p1188 = scmp.lt.s32.totalorder %s19, 0
      %s1189 = scalar_select %p1188, %s19, 0
      %s1190 = smul.addr %s1187, 3
      %s1191 = sadd.s32 %s1189, %s1190
      %s1192 = smul.addr %s1185, 72
      %s1193 = sadd.s32 %s1191, %s1192
      %s1194 = smul.addr %s1193, 8
      %s1195 = scalar_lea.vmem %s3, %s1194
      // Predicated region
      $region40: #{transposed_upsample.1} parent=31 // pred_check
        %p1196 = pneg %p133
      $region41: #{transposed_upsample.1} parent=31 // pred_check_branch
        %1198 = sbr.rel (%p1196) target = $region43
      $region42: #{transposed_upsample.1} parent=31 // pred_region
        %s1199 = smul.u32 24, %s21
      $region43: #{transposed_upsample.1} parent=31 // pred_fallthru
        _
    $region32: #{transposed_upsample.1} parent=5 // pred_fallthru
      _
    %p1200 = scmp.le.s32.totalorder 2, %s9
    // Predicated region
    $region44: #{transposed_upsample.1} parent=5 // pred_check
      %p1201 = pneg %p1200
    $region45: #{transposed_upsample.1} parent=5 // pred_check_branch
      %1203 = sbr.rel (%p1201) target = $region47
    $region46: #{transposed_upsample.1} parent=5 // pred_region
      %s1204 = ssub.s32 %s9, 2
      // Predicated region
      $region48: #{transposed_upsample.1} parent=46 // pred_check
        %p1205 = pneg %p139
      $region49: #{transposed_upsample.1} parent=46 // pred_check_branch
        %1207 = sbr.rel (%p1205) target = $region51
      $region50: #{transposed_upsample.1} parent=46 // pred_region
        %s1208 = smul.u32 24, %s24
        %p1209 = scmp.lt.s32.totalorder %s23, 1
        %s1210 = scalar_select %p1209, %s23, 1
        %p1211 = scmp.lt.s32.totalorder %s1208, 23
        %s1212 = scalar_select %p1211, %s1208, 23
        %p1213 = scmp.lt.s32.totalorder %s22, 0
        %s1214 = scalar_select %p1213, %s22, 0
        %s1215 = smul.addr %s1212, 3
        %s1216 = sadd.s32 %s1214, %s1215
        %s1217 = smul.addr %s1210, 72
        %s1218 = sadd.s32 %s1216, %s1217
        %s1219 = smul.addr %s1218, 8
        %s1220 = scalar_lea.vmem %s3, %s1219
      $region51: #{transposed_upsample.1} parent=46 // pred_fallthru
        _
    $region47: #{transposed_upsample.1} parent=5 // pred_fallthru
      _
  $region6: #{transposed_upsample.1} parent=0 // loop_footer
    %s13 = sadd.s32 1, %s9
  $region7: #{transposed_upsample.1} parent=0 // loop_footer_branch
    %8 = sbr.rel target = $region3
  $region8: #{transposed_upsample.1} parent=0 // loop_exit
    _

</llo_original>
